<compile_context>
chip_gen: v6e
topology: v6e:2x2x1
jax: 0.10.0
libtpu: 0.0.40
codegen_flags: <defaults>
</compile_context>

<pallas_src>
import functools

import jax
import jax.numpy as jnp
from jax import lax
from jax.experimental import pallas as pl
from jax.experimental.pallas import tpu as pltpu


def _sdpa_kernel(q_ref, k_ref, v_ref, bias_ref, ctx_ref, *prob_refs, scale):
    """One grid step = one batch element x one block of `hb` heads.

    q_ref/k_ref/v_ref : (hb, S, D)  MXU feed dtype (bf16 by default)
    bias_ref          : (S, S)      f32 additive mask bias (0 / -1e9), shared
                                    by all heads of this batch element
    ctx_ref           : (hb, S, D)  context output (input dtype)
    prob_refs         : optionally ((hb, S, S),) attention probabilities
    """
    # Fold 1/sqrt(d_head) into Q (S*D mults instead of S*S).
    q = q_ref[...] * jnp.asarray(scale, dtype=q_ref.dtype)
    k = k_ref[...]
    v = v_ref[...]

    # scores[h] = Q[h] @ K[h]^T, contracting D directly (no K transpose),
    # low-precision MXU feeds with f32 accumulation.
    scores = lax.dot_general(
        q, k,
        dimension_numbers=(((2,), (2,)), ((0,), (0,))),
        preferred_element_type=jnp.float32)                  # (hb, S, S) f32

    # masked_fill_(attn_mask, -1e9) as a single additive op; the bias is
    # per-batch and broadcast over the hb heads of this block.
    scores = scores + bias_ref[...][None, :, :]

    # Numerically stable softmax over the last dim (matches nn.Softmax).
    m = jnp.max(scores, axis=-1, keepdims=True)
    e = jnp.exp(scores - m)
    denom = jnp.sum(e, axis=-1, keepdims=True)
    # Exact reciprocal of the (hb, S, 1) denominator (cheap) so that stored
    # probability rows sum to 1; single multiply over (hb, S, S).
    prob_f32 = e * (jnp.float32(1.0) / denom)

    # TODO(synk): nn.Dropout(p=0.1) training-mode behaviour (random mask +
    # 1/(1-p) scaling via pltpu.prng_seed / pltpu.prng_random_bits) is
    # omitted; eval-mode dropout is the identity.

    # Single downcast pass over (hb, S, S), reused for the PV matmul and
    # (when dtypes match) for the prob writeback.
    prob_lo = prob_f32.astype(v.dtype)

    ctx = lax.dot_general(
        prob_lo, v,
        dimension_numbers=(((2,), (1,)), ((0,), (0,))),
        preferred_element_type=jnp.float32)                  # (hb, S, D) f32

    ctx_ref[...] = ctx.astype(ctx_ref.dtype)
    if prob_refs:                                            # static python branch
        prob_ref = prob_refs[0]
        if prob_ref.dtype == prob_lo.dtype:
            prob_ref[...] = prob_lo
        else:
            prob_ref[...] = prob_f32.astype(prob_ref.dtype)


def _vmem_capacity_bytes():
    """Physical VMEM of this generation (128 MiB v5e/v6e, 64 MiB v7x)."""
    try:
        cap = getattr(pltpu.get_tpu_info(), "vmem_capacity_bytes", None)
        if cap:
            return int(cap)
    except Exception:
        pass
    return 64 * 1024 * 1024      # conservative (v7x-sized) fallback


def _pick_heads_per_block(batch, n_heads, s, d, feed_isz, ctx_isz, prob_isz,
                          return_prob, vmem_budget):
    """Largest head-block whose pipelined working set fits `vmem_budget`,
    preferring an even total grid extent so the two v7x TensorCores (and the
    megacore sharding of the "parallel" axes generally) stay balanced."""

    def working_set(hb):
        b = 2 * 3 * hb * s * d * feed_isz        # q, k, v blocks (double-buffered)
        b += 2 * s * s * 4                       # f32 additive bias (double-buffered)
        b += 2 * hb * s * d * ctx_isz            # ctx output block (double-buffered)
        if return_prob:
            b += 2 * hb * s * s * prob_isz       # prob output block (double-buffered)
        b += 3 * hb * s * s * 4                  # f32 scores / exp / prob temporaries
        b += hb * s * s * feed_isz               # low-precision prob for the PV matmul
        return b

    fitting = [h for h in range(1, n_heads + 1)
               if n_heads % h == 0 and working_set(h) <= vmem_budget]
    if not fitting:
        return 1
    grid_points = lambda h: batch * (n_heads // h)
    even = [h for h in fitting if grid_points(h) % 2 == 0 or grid_points(h) == 1]
    pool = even if even else fitting
    return max(pool)


def scaled_dot_product_attention(Q, K, V, attn_mask, *, d_head,
                                 heads_per_block=None,
                                 compute_dtype=jnp.bfloat16,
                                 return_prob=True,
                                 prob_dtype=None):
    """Q, K, V: [B, H, S, D]; attn_mask: [B|1, 1|H, S, S] or [B|1, S, S]
    (nonzero => masked out, as in masked_fill_).

    Returns (context, attn_prob), or just context when return_prob=False.

    The mask is assumed not to vary across heads (this Transformer builds one
    mask per batch element and repeats it over heads), so it is shipped once
    per batch element as a f32 additive bias instead of once per head.
    """
    B, H, S, D = Q.shape
    scale = 1.0 / (float(d_head) ** 0.5)

    # MXU feed dtype: bf16 by default (full MXU rate + half the Q/K/V HBM
    # bytes for f32 models); f32 accumulation happens in-kernel.
    q = Q.astype(compute_dtype)
    k = K.astype(compute_dtype)
    v = V.astype(compute_dtype)

    # Dedupe the mask across heads and convert to a 0 / -1e9 additive bias.
    am = jnp.asarray(attn_mask)
    if am.ndim == 4:
        # TODO(synk): genuinely head-varying masks would need a per-head bias path.
        am = am[:, 0]
    am = jnp.broadcast_to(am, (B, S, S))
    bias = jnp.where(am != 0, jnp.float32(-1000000000.0), jnp.float32(0.0))

    if prob_dtype is None:
        prob_dtype = compute_dtype

    cap = _vmem_capacity_bytes()
    vmem_budget = int(cap * 0.6)
    feed_isz = jnp.dtype(compute_dtype).itemsize
    if heads_per_block is None:
        heads_per_block = _pick_heads_per_block(
            B, H, S, D, feed_isz,
            jnp.dtype(Q.dtype).itemsize, jnp.dtype(prob_dtype).itemsize,
            return_prob, vmem_budget)
    hb = heads_per_block
    assert H % hb == 0, "heads_per_block must divide n_head"

    grid = (B, H // hb)
    qkv_spec = pl.BlockSpec((None, hb, S, D), lambda b, h: (b, h, 0, 0))
    bias_spec = pl.BlockSpec((None, S, S), lambda b, h: (b, 0, 0))
    ctx_spec = pl.BlockSpec((None, hb, S, D), lambda b, h: (b, h, 0, 0))
    prob_spec = pl.BlockSpec((None, hb, S, S), lambda b, h: (b, h, 0, 0))

    out_shape = [jax.ShapeDtypeStruct((B, H, S, D), Q.dtype)]
    out_specs = [ctx_spec]
    if return_prob:
        out_shape.append(jax.ShapeDtypeStruct((B, H, S, S), prob_dtype))
        out_specs.append(prob_spec)

    # Explicit scoped-VMEM limit matching the picker budget (+25% headroom),
    # clipped to this generation's physical VMEM.
    vmem_limit = int(min(cap, vmem_budget * 1.25))

    kernel = functools.partial(_sdpa_kernel, scale=scale)

    outs = pl.pallas_call(
        kernel,
        out_shape=tuple(out_shape),
        grid_spec=pltpu.PrefetchScalarGridSpec(
            num_scalar_prefetch=0,
            grid=grid,
            in_specs=[qkv_spec, qkv_spec, qkv_spec, bias_spec],
            out_specs=tuple(out_specs),
        ),
        compiler_params=pltpu.CompilerParams(
            dimension_semantics=("parallel", "parallel"),
            vmem_limit_bytes=vmem_limit),
    )(q, k, v, bias)

    if return_prob:
        ctx, prob = outs
        return ctx, prob
    (ctx,) = outs
    return ctx


def _reference(Q, K, V, attn_mask, d_head):
    scale = 1.0 / (float(d_head) ** 0.5)
    scores = jnp.einsum("bhqd,bhkd->bhqk", Q, K) * scale
    scores = jnp.where(attn_mask, -1000000000.0, scores)
    prob = jax.nn.softmax(scores, axis=-1)
    ctx = jnp.einsum("bhqk,bhkd->bhqd", prob, V)
    return ctx, prob


if __name__ == "__main__":
    # Small shapes consistent with the module: n_head=4, d_head=64, short seq.
    B, H, S, D = 2, 4, 8, 64

    key = jax.random.PRNGKey(0)
    kq, kk, kv = jax.random.split(key, 3)
    Q = jax.random.normal(kq, (B, H, S, D), dtype=jnp.float32)
    K = jax.random.normal(kk, (B, H, S, D), dtype=jnp.float32)
    V = jax.random.normal(kv, (B, H, S, D), dtype=jnp.float32)

    # Causal + key-padding mask (True => masked out), one mask per batch
    # element broadcast over heads -- the shape this Transformer produces.
    causal = jnp.triu(jnp.ones((S, S), dtype=bool), k=1)
    lengths = jnp.array([S, S - 2])
    key_pad = jnp.arange(S)[None, :] >= lengths[:, None]              # [B, S]
    attn_mask = (causal[None, :, :] | key_pad[:, None, :])[:, None]   # [B,1,S,S]

    ctx_ref, prob_ref = _reference(Q, K, V, attn_mask, D)

    # 1) Default performance configuration: bf16 MXU feeds, bf16 prob output.
    #    Tolerances cover the standard bf16-attention rounding (f32 accum).
    ctx, prob = scaled_dot_product_attention(Q, K, V, attn_mask, d_head=D)
    jax.block_until_ready((ctx, prob))
    assert jnp.allclose(ctx, ctx_ref, atol=5e-2, rtol=5e-2), "context mismatch (bf16 path)"
    assert jnp.allclose(prob.astype(jnp.float32), prob_ref, atol=5e-2, rtol=5e-2), \
        "prob mismatch (bf16 path)"

    # 2) Exact-parity configuration: f32 feeds and f32 prob output.
    ctx32, prob32 = scaled_dot_product_attention(
        Q, K, V, attn_mask, d_head=D,
        compute_dtype=jnp.float32, prob_dtype=jnp.float32)
    jax.block_until_ready((ctx32, prob32))
    assert jnp.allclose(ctx32, ctx_ref, atol=1e-3, rtol=1e-3), "context mismatch (f32 path)"
    assert jnp.allclose(prob32, prob_ref, atol=1e-3, rtol=1e-3), "prob mismatch (f32 path)"

    # 3) Inference path: no prob writeback at all.
    ctx_only = scaled_dot_product_attention(
        Q, K, V, attn_mask, d_head=D, return_prob=False)
    jax.block_until_ready(ctx_only)
    assert jnp.allclose(ctx_only, ctx_ref, atol=5e-2, rtol=5e-2), \
        "context mismatch (ctx-only path)"

    print("KERNEL_OK")
</pallas_src>

<mosaic_0001>
module attributes {stable_mosaic.version = 11 : i64} {
  func.func @_sdpa_kernel(%arg0: i32, %arg1: i32, %arg2: memref<1x4x8x64xbf16, #tpu.memory_space<vmem>>, %arg3: memref<1x4x8x64xbf16, #tpu.memory_space<vmem>>, %arg4: memref<1x4x8x64xbf16, #tpu.memory_space<vmem>>, %arg5: memref<1x8x8xf32, #tpu.memory_space<vmem>>, %arg6: memref<1x4x8x64xf32, #tpu.memory_space<vmem>>, %arg7: memref<1x4x8x8xbf16, #tpu.memory_space<vmem>>) attributes {dimension_semantics = [#tpu.dimension_semantics<parallel>, #tpu.dimension_semantics<parallel>], iteration_bounds = array<i64: 2, 1>, scalar_prefetch = 0 : i64, scratch_operands = 0 : i64, tpu.core_type = #tpu.core_type<tc>, window_params = [{transform_indices = @transform_0, window_bounds = array<i64: 1, 4, 8, 64>}, {transform_indices = @transform_1, window_bounds = array<i64: 1, 4, 8, 64>}, {transform_indices = @transform_2, window_bounds = array<i64: 1, 4, 8, 64>}, {transform_indices = @transform_3, window_bounds = array<i64: 1, 8, 8>}, {transform_indices = @transform_4, window_bounds = array<i64: 1, 4, 8, 64>}, {transform_indices = @transform_5, window_bounds = array<i64: 1, 4, 8, 8>}]} {
    %c0 = arith.constant 0 : index
    %c0_0 = arith.constant 0 : index
    %c0_1 = arith.constant 0 : index
    %c0_2 = arith.constant 0 : index
    %0 = vector.load %arg2[%c0, %c0_0, %c0_1, %c0_2] : memref<1x4x8x64xbf16, #tpu.memory_space<vmem>>, vector<1x4x8x64xbf16>
    %1 = vector.shape_cast %0 : vector<1x4x8x64xbf16> to vector<4x8x64xbf16>
    %cst = arith.constant 1.250000e-01 : bf16
    %2 = vector.broadcast %cst : bf16 to vector<4x8x64xbf16>
    %3 = arith.mulf %1, %2 : vector<4x8x64xbf16>
    %c0_3 = arith.constant 0 : index
    %c0_4 = arith.constant 0 : index
    %c0_5 = arith.constant 0 : index
    %c0_6 = arith.constant 0 : index
    %4 = vector.load %arg3[%c0_3, %c0_4, %c0_5, %c0_6] : memref<1x4x8x64xbf16, #tpu.memory_space<vmem>>, vector<1x4x8x64xbf16>
    %5 = vector.shape_cast %4 : vector<1x4x8x64xbf16> to vector<4x8x64xbf16>
    %c0_7 = arith.constant 0 : index
    %c0_8 = arith.constant 0 : index
    %c0_9 = arith.constant 0 : index
    %c0_10 = arith.constant 0 : index
    %6 = vector.load %arg4[%c0_7, %c0_8, %c0_9, %c0_10] : memref<1x4x8x64xbf16, #tpu.memory_space<vmem>>, vector<1x4x8x64xbf16>
    %7 = vector.shape_cast %6 : vector<1x4x8x64xbf16> to vector<4x8x64xbf16>
    %cst_11 = arith.constant dense<0.000000e+00> : vector<4x8x8xf32>
    %8 = tpu.matmul %3, %5, %cst_11 {dimension_numbers = #tpu.dot_dimension_numbers<[2], [2], [1], [1], [0, 0, 0, 1, 1, 1], [0], [0]>} : vector<4x8x64xbf16>, vector<4x8x64xbf16>, vector<4x8x8xf32> -> vector<4x8x8xf32>
    %c0_12 = arith.constant 0 : index
    %c0_13 = arith.constant 0 : index
    %c0_14 = arith.constant 0 : index
    %9 = vector.load %arg5[%c0_12, %c0_13, %c0_14] : memref<1x8x8xf32, #tpu.memory_space<vmem>>, vector<1x8x8xf32>
    %10 = vector.shape_cast %9 : vector<1x8x8xf32> to vector<8x8xf32>
    %11 = vector.shape_cast %10 : vector<8x8xf32> to vector<1x8x8xf32>
    %12 = vector.broadcast %11 : vector<1x8x8xf32> to vector<4x8x8xf32>
    %13 = arith.addf %8, %12 : vector<4x8x8xf32>
    %cst_15 = arith.constant dense<0xFF800000> : vector<4x8xf32>
    %14 = vector.multi_reduction <maximumf>, %13, %cst_15 [2] : vector<4x8x8xf32> to vector<4x8xf32>
    %15 = vector.shape_cast %14 : vector<4x8xf32> to vector<4x8x1xf32>
    %16 = vector.broadcast %15 : vector<4x8x1xf32> to vector<4x8x8xf32>
    %17 = arith.subf %13, %16 : vector<4x8x8xf32>
    %18 = math.exp %17 : vector<4x8x8xf32>
    %cst_16 = arith.constant dense<0.000000e+00> : vector<4x8xf32>
    %19 = vector.multi_reduction <add>, %18, %cst_16 [2] : vector<4x8x8xf32> to vector<4x8xf32>
    %20 = vector.shape_cast %19 : vector<4x8xf32> to vector<4x8x1xf32>
    %cst_17 = arith.constant 1.000000e+00 : f32
    %21 = vector.broadcast %cst_17 : f32 to vector<4x8x1xf32>
    %22 = arith.divf %21, %20 : vector<4x8x1xf32>
    %23 = vector.broadcast %22 : vector<4x8x1xf32> to vector<4x8x8xf32>
    %24 = arith.mulf %18, %23 : vector<4x8x8xf32>
    %25 = arith.truncf %24 : vector<4x8x8xf32> to vector<4x8x8xbf16>
    %cst_18 = arith.constant dense<0.000000e+00> : vector<4x8x64xf32>
    %26 = tpu.matmul %25, %7, %cst_18 {dimension_numbers = #tpu.dot_dimension_numbers<[2], [1], [1], [2], [0, 0, 0, 1, 1, 2], [0], [0]>} : vector<4x8x8xbf16>, vector<4x8x64xbf16>, vector<4x8x64xf32> -> vector<4x8x64xf32>
    %c0_19 = arith.constant 0 : index
    %c0_20 = arith.constant 0 : index
    %c0_21 = arith.constant 0 : index
    %c0_22 = arith.constant 0 : index
    %27 = vector.load %arg6[%c0_19, %c0_20, %c0_21, %c0_22] : memref<1x4x8x64xf32, #tpu.memory_space<vmem>>, vector<1x4x8x64xf32>
    %28 = vector.shape_cast %27 : vector<1x4x8x64xf32> to vector<4x8x64xf32>
    %29 = vector.shape_cast %26 : vector<4x8x64xf32> to vector<1x4x8x64xf32>
    tpu.vector_store %arg6[%c0_19, %c0_20, %c0_21, %c0_22], %29 {strides = array<i32>} : memref<1x4x8x64xf32, #tpu.memory_space<vmem>>, vector<1x4x8x64xf32>,
    %c0_23 = arith.constant 0 : index
    %c0_24 = arith.constant 0 : index
    %c0_25 = arith.constant 0 : index
    %c0_26 = arith.constant 0 : index
    %30 = vector.load %arg7[%c0_23, %c0_24, %c0_25, %c0_26] : memref<1x4x8x8xbf16, #tpu.memory_space<vmem>>, vector<1x4x8x8xbf16>
    %31 = vector.shape_cast %30 : vector<1x4x8x8xbf16> to vector<4x8x8xbf16>
    %32 = vector.shape_cast %25 : vector<4x8x8xbf16> to vector<1x4x8x8xbf16>
    tpu.vector_store %arg7[%c0_23, %c0_24, %c0_25, %c0_26], %32 {strides = array<i32>} : memref<1x4x8x8xbf16, #tpu.memory_space<vmem>>, vector<1x4x8x8xbf16>,
    return
  }
  func.func @transform_0(%arg0: i32, %arg1: i32) -> (i32, i32, i32, i32) {
    %c0_i32 = arith.constant 0 : i32
    %c0_i32_0 = arith.constant 0 : i32
    %c0_i32_1 = arith.constant 0 : i32
    return %arg0, %arg1, %c0_i32, %c0_i32_0 : i32, i32, i32, i32
  }
  func.func @transform_1(%arg0: i32, %arg1: i32) -> (i32, i32, i32, i32) {
    %c0_i32 = arith.constant 0 : i32
    %c0_i32_0 = arith.constant 0 : i32
    %c0_i32_1 = arith.constant 0 : i32
    return %arg0, %arg1, %c0_i32, %c0_i32_0 : i32, i32, i32, i32
  }
  func.func @transform_2(%arg0: i32, %arg1: i32) -> (i32, i32, i32, i32) {
    %c0_i32 = arith.constant 0 : i32
    %c0_i32_0 = arith.constant 0 : i32
    %c0_i32_1 = arith.constant 0 : i32
    return %arg0, %arg1, %c0_i32, %c0_i32_0 : i32, i32, i32, i32
  }
  func.func @transform_3(%arg0: i32, %arg1: i32) -> (i32, i32, i32) {
    %c0_i32 = arith.constant 0 : i32
    %c0_i32_0 = arith.constant 0 : i32
    %c0_i32_1 = arith.constant 0 : i32
    return %arg0, %c0_i32, %c0_i32_0 : i32, i32, i32
  }
  func.func @transform_4(%arg0: i32, %arg1: i32) -> (i32, i32, i32, i32) {
    %c0_i32 = arith.constant 0 : i32
    %c0_i32_0 = arith.constant 0 : i32
    %c0_i32_1 = arith.constant 0 : i32
    return %arg0, %arg1, %c0_i32, %c0_i32_0 : i32, i32, i32, i32
  }
  func.func @transform_5(%arg0: i32, %arg1: i32) -> (i32, i32, i32, i32) {
    %c0_i32 = arith.constant 0 : i32
    %c0_i32_0 = arith.constant 0 : i32
    %c0_i32_1 = arith.constant 0 : i32
    return %arg0, %arg1, %c0_i32, %c0_i32_0 : i32, i32, i32, i32
  }
}

</mosaic_0001>

<llo_original>
// kernel: tpu_custom_call.1
$region0: #{tpu_custom_call.1}
  #allocation0 [shape = 'u32[]', space=smem, size = 0x4, offset = 0x4, fixed_abs, tag = 'smem constant byte address 0x4 - core index']
  #allocation1 [shape = 'u32[144,128]{1,0:T(1,128)}', space=vmem, size = 0x12000, scoped, tag = 'internal scratch']
  %s0 = inlined_call_operand.hbm [shape: bf16[2,4,8,64], index: 0, kind: input, shape index: {}]
  %s1 = inlined_call_operand.hbm [shape: bf16[2,4,8,64], index: 1, kind: input, shape index: {}]
  %s2 = inlined_call_operand.hbm [shape: bf16[2,4,8,64], index: 2, kind: input, shape index: {}]
  %s3 = inlined_call_operand.hbm [shape: f32[2,8,8], index: 3, kind: input, shape index: {}]
  %s4 = inlined_call_operand.hbm [shape: f32[2,4,8,64], index: 4, kind: output, shape index: {0}]
  %s5 = inlined_call_operand.hbm [shape: bf16[2,4,8,8], index: 5, kind: output, shape index: {1}]
  %6 = xla_tuple %s4, %s5
  %s7 = sld [smem:[#allocation0]]
  $region73: #{tpu_custom_call.1} parent=0
    _
  %s9 = ssub.s32 1, %s7
  %s10 = scalar_select 0, %s9, %s7
  $region1: #{tpu_custom_call.1} parent=0
    #allocation2 [shape = 'u8[16384]{0}', space=vmem, size = 0x4000, scoped, tag = 'input window, operand 0']
    #allocation3 [shape = 's32[2]{0}', space=sflag, size = 0x8, scoped, tag = 'scoped memory for tpu_custom_call.1']
    #allocation4 [shape = 's32[2]{0}', space=sflag, size = 0x8, scoped, tag = 'scoped memory for tpu_custom_call.1']
    #allocation5 [shape = 'u8[16384]{0}', space=vmem, size = 0x4000, scoped, tag = 'input window, operand 1']
    #allocation6 [shape = 's32[2]{0}', space=sflag, size = 0x8, scoped, tag = 'scoped memory for tpu_custom_call.1']
    #allocation7 [shape = 'u8[16384]{0}', space=vmem, size = 0x4000, scoped, tag = 'input window, operand 2']
    #allocation8 [shape = 'u8[8192]{0}', space=vmem, size = 0x2000, scoped, tag = 'input window, operand 3']
    #allocation9 [shape = 's32[2]{0}', space=sflag, size = 0x8, scoped, tag = 'scoped memory for tpu_custom_call.1']
    #allocation10 [shape = 'u8[32768]{0}', space=vmem, size = 0x8000, scoped, tag = 'output window, operand 0']
    #allocation11 [shape = 'u8[16384]{0}', space=vmem, size = 0x4000, scoped, tag = 'output window, operand 1']
    #allocation12 [shape = 's32[2]{0}', space=sflag, size = 0x8, scoped, tag = 'scoped memory for tpu_custom_call.1']
    %11 = vsyncpa [#allocation3], 0
    %s12 = scalar_lea.sflag [#allocation3], 1
    %13 = vsyncpa %s12, 0
    %14 = vsyncpa [#allocation6], 0
    %s15 = scalar_lea.sflag [#allocation6], 1
    %16 = vsyncpa %s15, 0
    %17 = vsyncpa [#allocation9], 0
    %s18 = scalar_lea.sflag [#allocation9], 1
    %19 = vsyncpa %s18, 0
    %20 = vsyncpa [#allocation4], 0
    %s21 = scalar_lea.sflag [#allocation4], 1
    %22 = vsyncpa %s21, 0
    %23 = vsyncpa [#allocation12], 0
    %s24 = scalar_lea.sflag [#allocation12], 1
    %25 = vsyncpa %s24, 0
    loop: start=0, step=1, limit=4
    $region2: #{tpu_custom_call.1} parent=1 // loop_pre_header
      _
    $region3: #{tpu_custom_call.1} parent=1 // loop_header
      %s27 = sphi 0, %s31
      %p28 = scmp.ge.s32.totalorder %s27, 4
      %s34 = sphi 0, %s46
      %s35 = sphi 0, %s42
      %s36 = sphi 0, %s34
      %s37 = sphi 0, %s35
      %s38 = sphi 0, %s36
      %s39 = sphi 0, %s37
      %s51 = sphi 0, %s53
      %s54 = sphi 0, %s51
      %s55 = sphi 0, %s54
      %s71 = sphi 0, %s55
      %s79 = sphi 0, %s81
      %s82 = sphi 0, %s79
      %s83 = sphi 0, %s82
      %s99 = sphi 0, %s83
      %s107 = sphi 0, %s109
      %s110 = sphi 0, %s107
      %s111 = sphi 0, %s110
      %s127 = sphi 0, %s111
      %s133 = sphi 0, %s135
      %s136 = sphi 0, %s133
      %s137 = sphi 0, %s136
      %s153 = sphi 0, %s137
      %s161 = sphi 0, %s163
      %s164 = sphi 0, %s161
      %s165 = sphi 0, %s164
      %s181 = sphi 0, %s165
      %s189 = sphi 0, %s191
      %s192 = sphi 0, %s189
      %s193 = sphi 0, %s192
      %s209 = sphi 0, %s193
    $region4: #{tpu_custom_call.1} parent=1 // loop_header_branch
      %30 = sbr.rel (%p28) target = $region8
    $region5: #{tpu_custom_call.1} parent=1 // loop_body
      %s32 = ssub.s32 %s27, 1
      %s33 = ssub.s32 %s27, 2
      %s40 = sadd.s32 1, %s35
      %p41 = scmp.ge.s32.totalorder %s40, 1
      %s42 = scalar_select %p41, 0, %s40
      %s43 = sadd.s32 1, %s34
      %s44 = scalar_select %p41, %s43, %s34
      %p45 = scmp.ge.s32.totalorder %s44, 2
      %s46 = scalar_select %p45, 0, %s44
      %s47 = ssub.s32 %s34, %s46
      %s48 = ssub.s32 %s35, %s42
      %s49 = sor.u32 %s47, %s48
      %p50 = scmp.eq.s32.totalorder %s49, 0
      %s52 = sadd.s32 %s51, 1
      %s53 = scalar_select %p50, %s51, %s52
      %p56 = pneg %p50
      %p57 = scmp.eq.s32.totalorder %s27, 1
      %p58 = por %p56, %p57
      %p59 = scmp.ne.s32.totalorder %s51, %s54
      %p60 = scmp.eq.s32.totalorder %s27, 0
      %p61 = por %p59, %p60
      %p62 = scmp.ne.s32.totalorder %s51, %s54
      %p63 = scmp.eq.s32.totalorder %s32, 1
      %p64 = por %p62, %p63
      %p65 = scmp.ne.s32.totalorder %s54, %s55
      %p66 = scmp.eq.s32.totalorder %s32, 0
      %p67 = por %p65, %p66
      %p68 = scmp.ne.s32.totalorder %s54, %s55
      %p69 = scmp.eq.s32.totalorder %s33, 1
      %p70 = por %p68, %p69
      %p72 = scmp.ne.s32.totalorder %s55, %s71
      %p73 = scmp.eq.s32.totalorder %s33, 0
      %p74 = por %p72, %p73
      %s75 = ssub.s32 %s34, %s46
      %s76 = ssub.s32 %s35, %s42
      %s77 = sor.u32 %s75, %s76
      %p78 = scmp.eq.s32.totalorder %s77, 0
      %s80 = sadd.s32 %s79, 1
      %s81 = scalar_select %p78, %s79, %s80
      %p84 = pneg %p78
      %p85 = scmp.eq.s32.totalorder %s27, 1
      %p86 = por %p84, %p85
      %p87 = scmp.ne.s32.totalorder %s79, %s82
      %p88 = scmp.eq.s32.totalorder %s27, 0
      %p89 = por %p87, %p88
      %p90 = scmp.ne.s32.totalorder %s79, %s82
      %p91 = scmp.eq.s32.totalorder %s32, 1
      %p92 = por %p90, %p91
      %p93 = scmp.ne.s32.totalorder %s82, %s83
      %p94 = scmp.eq.s32.totalorder %s32, 0
      %p95 = por %p93, %p94
      %p96 = scmp.ne.s32.totalorder %s82, %s83
      %p97 = scmp.eq.s32.totalorder %s33, 1
      %p98 = por %p96, %p97
      %p100 = scmp.ne.s32.totalorder %s83, %s99
      %p101 = scmp.eq.s32.totalorder %s33, 0
      %p102 = por %p100, %p101
      %s103 = ssub.s32 %s34, %s46
      %s104 = ssub.s32 %s35, %s42
      %s105 = sor.u32 %s103, %s104
      %p106 = scmp.eq.s32.totalorder %s105, 0
      %s108 = sadd.s32 %s107, 1
      %s109 = scalar_select %p106, %s107, %s108
      %p112 = pneg %p106
      %p113 = scmp.eq.s32.totalorder %s27, 1
      %p114 = por %p112, %p113
      %p115 = scmp.ne.s32.totalorder %s107, %s110
      %p116 = scmp.eq.s32.totalorder %s27, 0
      %p117 = por %p115, %p116
      %p118 = scmp.ne.s32.totalorder %s107, %s110
      %p119 = scmp.eq.s32.totalorder %s32, 1
      %p120 = por %p118, %p119
      %p121 = scmp.ne.s32.totalorder %s110, %s111
      %p122 = scmp.eq.s32.totalorder %s32, 0
      %p123 = por %p121, %p122
      %p124 = scmp.ne.s32.totalorder %s110, %s111
      %p125 = scmp.eq.s32.totalorder %s33, 1
      %p126 = por %p124, %p125
      %p128 = scmp.ne.s32.totalorder %s111, %s127
      %p129 = scmp.eq.s32.totalorder %s33, 0
      %p130 = por %p128, %p129
      %s131 = ssub.s32 %s34, %s46
      %p132 = scmp.eq.s32.totalorder %s131, 0
      %s134 = sadd.s32 %s133, 1
      %s135 = scalar_select %p132, %s133, %s134
      %p138 = pneg %p132
      %p139 = scmp.eq.s32.totalorder %s27, 1
      %p140 = por %p138, %p139
      %p141 = scmp.ne.s32.totalorder %s133, %s136
      %p142 = scmp.eq.s32.totalorder %s27, 0
      %p143 = por %p141, %p142
      %p144 = scmp.ne.s32.totalorder %s133, %s136
      %p145 = scmp.eq.s32.totalorder %s32, 1
      %p146 = por %p144, %p145
      %p147 = scmp.ne.s32.totalorder %s136, %s137
      %p148 = scmp.eq.s32.totalorder %s32, 0
      %p149 = por %p147, %p148
      %p150 = scmp.ne.s32.totalorder %s136, %s137
      %p151 = scmp.eq.s32.totalorder %s33, 1
      %p152 = por %p150, %p151
      %p154 = scmp.ne.s32.totalorder %s137, %s153
      %p155 = scmp.eq.s32.totalorder %s33, 0
      %p156 = por %p154, %p155
      %s157 = ssub.s32 %s34, %s46
      %s158 = ssub.s32 %s35, %s42
      %s159 = sor.u32 %s157, %s158
      %p160 = scmp.eq.s32.totalorder %s159, 0
      %s162 = sadd.s32 %s161, 1
      %s163 = scalar_select %p160, %s161, %s162
      %p166 = pneg %p160
      %p167 = scmp.eq.s32.totalorder %s27, 1
      %p168 = por %p166, %p167
      %p169 = scmp.ne.s32.totalorder %s161, %s164
      %p170 = scmp.eq.s32.totalorder %s27, 0
      %p171 = por %p169, %p170
      %p172 = scmp.ne.s32.totalorder %s161, %s164
      %p173 = scmp.eq.s32.totalorder %s32, 1
      %p174 = por %p172, %p173
      %p175 = scmp.ne.s32.totalorder %s164, %s165
      %p176 = scmp.eq.s32.totalorder %s32, 0
      %p177 = por %p175, %p176
      %p178 = scmp.ne.s32.totalorder %s164, %s165
      %p179 = scmp.eq.s32.totalorder %s33, 1
      %p180 = por %p178, %p179
      %p182 = scmp.ne.s32.totalorder %s165, %s181
      %p183 = scmp.eq.s32.totalorder %s33, 0
      %p184 = por %p182, %p183
      %s185 = ssub.s32 %s34, %s46
      %s186 = ssub.s32 %s35, %s42
      %s187 = sor.u32 %s185, %s186
      %p188 = scmp.eq.s32.totalorder %s187, 0
      %s190 = sadd.s32 %s189, 1
      %s191 = scalar_select %p188, %s189, %s190
      %p194 = pneg %p188
      %p195 = scmp.eq.s32.totalorder %s27, 1
      %p196 = por %p194, %p195
      %p197 = scmp.ne.s32.totalorder %s189, %s192
      %p198 = scmp.eq.s32.totalorder %s27, 0
      %p199 = por %p197, %p198
      %p200 = scmp.ne.s32.totalorder %s189, %s192
      %p201 = scmp.eq.s32.totalorder %s32, 1
      %p202 = por %p200, %p201
      %p203 = scmp.ne.s32.totalorder %s192, %s193
      %p204 = scmp.eq.s32.totalorder %s32, 0
      %p205 = por %p203, %p204
      %p206 = scmp.ne.s32.totalorder %s192, %s193
      %p207 = scmp.eq.s32.totalorder %s33, 1
      %p208 = por %p206, %p207
      %p210 = scmp.ne.s32.totalorder %s193, %s209
      %p211 = scmp.eq.s32.totalorder %s33, 0
      %p212 = por %p210, %p211
      %p213 = scmp.le.s32.totalorder 1, %s27
      %p214 = scmp.lt.s32.totalorder %s27, 3
      %p215 = pnand %p213, %p214
      %p216 = pneg %p215
      // Predicated region
      $region9: #{tpu_custom_call.1} parent=5 // pred_check
        _
      $region10: #{tpu_custom_call.1} parent=5 // pred_check_branch
        %218 = sbr.rel (%p215) target = $region12
      $region11: #{tpu_custom_call.1} parent=5 // pred_region
        %s219 = ssub.s32 %s27, 1
      $region12: #{tpu_custom_call.1} parent=5 // pred_fallthru
        _
      %p220 = scmp.lt.s32.totalorder %s27, 2
      // Predicated region
      $region13: #{tpu_custom_call.1} parent=5 // pred_check
        %p221 = pneg %p220
      $region14: #{tpu_custom_call.1} parent=5 // pred_check_branch
        %223 = sbr.rel (%p221) target = $region16
      $region15: #{tpu_custom_call.1} parent=5 // pred_region
        // Predicated region
        $region17: #{tpu_custom_call.1} parent=15 // pred_check
          %p224 = pneg %p61
        $region18: #{tpu_custom_call.1} parent=15 // pred_check_branch
          %226 = sbr.rel (%p224) target = $region20
        $region19: #{tpu_custom_call.1} parent=15 // pred_region
          %s227 = sand.u32 %s51, 1
          %s228 = scalar_lea.sflag [#allocation3], %s227
          %s229 = sand.u32 %s51, 1
          %s230 = smul.addr %s229, 16
          %s231 = scalar_lea.vmem [#allocation2], %s230
          %s232 = smul.u32 4, %s35
          %s234 = ssub.s32 256, 256
          %235 = vsyncadd %s228, %s234
          %s236 = smul.addr %s34, 4
          %s237 = sadd.s32 %s232, %s236
          %s238 = smul.addr %s237, 64
          %s239 = scalar_lea.hbm %s0, %s238
          %s240 = sshll.u32 %s231, 4
          %s241 = int_to_ptr.vmem [resolvable:$true] %s240
          %246 = dma.hbm_to_vmem [thread:$0]  %s239, 256, %s241, %s228, 64, 64, 4
        $region20: #{tpu_custom_call.1} parent=15 // pred_fallthru
          _
        // Predicated region
        $region21: #{tpu_custom_call.1} parent=15 // pred_check
          %p247 = pneg %p89
        $region22: #{tpu_custom_call.1} parent=15 // pred_check_branch
          %249 = sbr.rel (%p247) target = $region24
        $region23: #{tpu_custom_call.1} parent=15 // pred_region
          %s250 = sand.u32 %s27, 1
          %s251 = scalar_lea.sflag [#allocation6], %s250
          %s252 = sand.u32 %s79, 1
          %s253 = smul.addr %s252, 16
          %s254 = scalar_lea.vmem [#allocation5], %s253
          %s255 = smul.u32 4, %s35
          %s257 = ssub.s32 256, 256
          %258 = vsyncadd %s251, %s257
          %s259 = smul.addr %s34, 4
          %s260 = sadd.s32 %s255, %s259
          %s261 = smul.addr %s260, 64
          %s262 = scalar_lea.hbm %s1, %s261
          %s263 = sshll.u32 %s254, 4
          %s264 = int_to_ptr.vmem [resolvable:$true] %s263
          %269 = dma.hbm_to_vmem [thread:$0]  %s262, 256, %s264, %s251, 64, 64, 4
        $region24: #{tpu_custom_call.1} parent=15 // pred_fallthru
          _
        // Predicated region
        $region25: #{tpu_custom_call.1} parent=15 // pred_check
          %p270 = pneg %p117
        $region26: #{tpu_custom_call.1} parent=15 // pred_check_branch
          %272 = sbr.rel (%p270) target = $region28
        $region27: #{tpu_custom_call.1} parent=15 // pred_region
          %s273 = sand.u32 %s27, 1
          %s274 = scalar_lea.sflag [#allocation6], %s273
          %s275 = sand.u32 %s107, 1
          %s276 = smul.addr %s275, 16
          %s277 = scalar_lea.vmem [#allocation7], %s276
          %s278 = smul.u32 4, %s35
          %s280 = ssub.s32 256, 256
          %281 = vsyncadd %s274, %s280
          %s282 = smul.addr %s34, 4
          %s283 = sadd.s32 %s278, %s282
          %s284 = smul.addr %s283, 64
          %s285 = scalar_lea.hbm %s2, %s284
          %s286 = sshll.u32 %s277, 4
          %s287 = int_to_ptr.vmem [resolvable:$true] %s286
          %292 = dma.hbm_to_vmem [thread:$0]  %s285, 256, %s287, %s274, 64, 64, 4
        $region28: #{tpu_custom_call.1} parent=15 // pred_fallthru
          _
        // Predicated region
        $region29: #{tpu_custom_call.1} parent=15 // pred_check
          %p293 = pneg %p143
        $region30: #{tpu_custom_call.1} parent=15 // pred_check_branch
          %295 = sbr.rel (%p293) target = $region32
        $region31: #{tpu_custom_call.1} parent=15 // pred_region
          %s296 = sand.u32 %s133, 1
          %s297 = scalar_lea.sflag [#allocation9], %s296
          %s298 = sand.u32 %s133, 1
          %s299 = smul.addr %s298, 8
          %s300 = scalar_lea.vmem [#allocation8], %s299
          %s302 = ssub.s32 128, 128
          %303 = vsyncadd %s297, %s302
          %s304 = smul.addr %s34, 128
          %s305 = scalar_lea.hbm %s3, %s304
          %s307 = sshll.u32 %s300, 4
          %s308 = int_to_ptr.vmem [resolvable:$true] %s307
          %310 = dma.hbm_to_vmem [thread:$0]  %s305, 128, %s308, %s297
        $region32: #{tpu_custom_call.1} parent=15 // pred_fallthru
          _
      $region16: #{tpu_custom_call.1} parent=5 // pred_fallthru
        _
      %p311 = scmp.le.s32.totalorder 1, %s27
      %p312 = scmp.lt.s32.totalorder %s27, 3
      %p313 = pnand %p311, %p312
      %p314 = pneg %p313
      // Predicated region
      $region33: #{tpu_custom_call.1} parent=5 // pred_check
        _
      $region34: #{tpu_custom_call.1} parent=5 // pred_check_branch
        %316 = sbr.rel (%p313) target = $region36
      $region35: #{tpu_custom_call.1} parent=5 // pred_region
        %s317 = ssub.s32 %s27, 1
        %s318 = sand.u32 %s54, 1
        %s319 = scalar_lea.sflag [#allocation3], %s318
        %s320 = sand.u32 %s54, 1
        %s321 = smul.addr %s320, 16
        %s322 = scalar_lea.vmem [#allocation2], %s321
        // Predicated region
        $region37: #{tpu_custom_call.1} parent=35 // pred_check
          %p323 = pneg %p67
        $region38: #{tpu_custom_call.1} parent=35 // pred_check_branch
          %325 = sbr.rel (%p323) target = $region40
        $region39: #{tpu_custom_call.1} parent=35 // pred_region
          %326 = dma.done %s319, 256
        $region40: #{tpu_custom_call.1} parent=35 // pred_fallthru
          _
        %s327 = sand.u32 %s32, 1
        %s328 = scalar_lea.sflag [#allocation6], %s327
        %s329 = sand.u32 %s82, 1
        %s330 = smul.addr %s329, 16
        %s331 = scalar_lea.vmem [#allocation5], %s330
        // Predicated region
        $region41: #{tpu_custom_call.1} parent=35 // pred_check
          %p332 = pneg %p95
        $region42: #{tpu_custom_call.1} parent=35 // pred_check_branch
          %334 = sbr.rel (%p332) target = $region44
        $region43: #{tpu_custom_call.1} parent=35 // pred_region
          %335 = dma.done %s328, 256
        $region44: #{tpu_custom_call.1} parent=35 // pred_fallthru
          _
        %s336 = sand.u32 %s32, 1
        %s337 = scalar_lea.sflag [#allocation6], %s336
        %s338 = sand.u32 %s110, 1
        %s339 = smul.addr %s338, 16
        %s340 = scalar_lea.vmem [#allocation7], %s339
        // Predicated region
        $region45: #{tpu_custom_call.1} parent=35 // pred_check
          %p341 = pneg %p123
        $region46: #{tpu_custom_call.1} parent=35 // pred_check_branch
          %343 = sbr.rel (%p341) target = $region48
        $region47: #{tpu_custom_call.1} parent=35 // pred_region
          %344 = dma.done %s337, 256
        $region48: #{tpu_custom_call.1} parent=35 // pred_fallthru
          _
        %s345 = sand.u32 %s136, 1
        %s346 = scalar_lea.sflag [#allocation9], %s345
        %s347 = sand.u32 %s136, 1
        %s348 = smul.addr %s347, 8
        %s349 = scalar_lea.vmem [#allocation8], %s348
        // Predicated region
        $region49: #{tpu_custom_call.1} parent=35 // pred_check
          %p350 = pneg %p149
        $region50: #{tpu_custom_call.1} parent=35 // pred_check_branch
          %352 = sbr.rel (%p350) target = $region52
        $region51: #{tpu_custom_call.1} parent=35 // pred_region
          %353 = dma.done %s346, 128
        $region52: #{tpu_custom_call.1} parent=35 // pred_fallthru
          _
        %s354 = sand.u32 %s54, 1
        %s355 = scalar_lea.sflag [#allocation3], %s354
        %s356 = sand.u32 %s54, 1
        %s357 = smul.addr %s356, 16
        %s358 = scalar_lea.vmem [#allocation2], %s357
        %p359 = pneg %p67
        %p360 = pneg %p64
        %s361 = sand.u32 %s32, 1
        %s362 = scalar_lea.sflag [#allocation6], %s361
        %s363 = sand.u32 %s82, 1
        %s364 = smul.addr %s363, 16
        %s365 = scalar_lea.vmem [#allocation5], %s364
        %p366 = pneg %p95
        %p367 = pneg %p92
        %s368 = sand.u32 %s32, 1
        %s369 = scalar_lea.sflag [#allocation6], %s368
        %s370 = sand.u32 %s110, 1
        %s371 = smul.addr %s370, 16
        %s372 = scalar_lea.vmem [#allocation7], %s371
        %p373 = pneg %p123
        %p374 = pneg %p120
        %s375 = sand.u32 %s136, 1
        %s376 = scalar_lea.sflag [#allocation9], %s375
        %s377 = sand.u32 %s136, 1
        %s378 = smul.addr %s377, 8
        %s379 = scalar_lea.vmem [#allocation8], %s378
        %p380 = pneg %p149
        %p381 = pneg %p146
        %p382 = pneg %p177
        %p383 = pneg %p174
        %s384 = sand.u32 %s164, 1
        %s385 = scalar_lea.sflag [#allocation4], %s384
        %s386 = sand.u32 %s164, 1
        %s387 = smul.addr %s386, 32
        %s388 = scalar_lea.vmem [#allocation10], %s387
        %p389 = pneg %p205
        %p390 = pneg %p202
        %s391 = sand.u32 %s192, 1
        %s392 = scalar_lea.sflag [#allocation12], %s391
        %s393 = sand.u32 %s192, 1
        %s394 = smul.addr %s393, 16
        %s395 = scalar_lea.vmem [#allocation11], %s394
        %s396 = smul.u32 4, %s37
        %s397 = smul.u32 4, %s37
        %s398 = smul.u32 4, %s37
        %s399 = smul.u32 4, %s37
        %s400 = smul.u32 4, %s37
        %v403 = vld [vmem:[%s322] sm:$0xf]
        %v404 = vld [vmem:[%s322 + $0x4] sm:$0xf]
        %v405 = vld [vmem:[%s322 + $0x8] sm:$0xf]
        %v406 = vld [vmem:[%s322 + $0xc] sm:$0xf]
        %v407 = vmul.bf16 %v403, 1040203264
        %v408 = vmul.bf16 %v404, 1040203264
        %v409 = vmul.bf16 %v405, 1040203264
        %v410 = vmul.bf16 %v406, 1040203264
        %v411 = vld [vmem:[%s331] sm:$0xf]
        %v412 = vld [vmem:[%s331 + $0x4] sm:$0xf]
        %v413 = vld [vmem:[%s331 + $0x8] sm:$0xf]
        %v414 = vld [vmem:[%s331 + $0xc] sm:$0xf]
        %v415 = vld [vmem:[%s340] sm:$0xf]
        %v416 = vld [vmem:[%s340 + $0x4] sm:$0xf]
        %v417 = vld [vmem:[%s340 + $0x8] sm:$0xf]
        %v418 = vld [vmem:[%s340 + $0xc] sm:$0xf]
        %v419 = vld [vmem:[%s349] sm:$0xff]
        %vm420 = vcmask 523264
        %v422 = vsel %vm420, %v407, 0
        %v425 = vsel %vm420, %v411, 0
        %427 = vmatprep.subr.bf16.mxu0 0
        %428 = vmatpush1.bf16.xpose.msra.mxu0 0
        %429 = vmatprep.subr.bf16.mxu0 0
        %430 = vmatpush1.bf16.xpose.msra.mxu0 0
        %431 = vmatprep.subr.bf16.mxu0 0
        %432 = vmatpush1.bf16.xpose.msra.mxu0 0
        %433 = vmatprep.subr.bf16.mxu0 0
        %434 = vmatpush1.bf16.xpose.msra.mxu0 0
        %435 = vmatprep.subr.bf16.mxu0 0
        %436 = vmatpush1.bf16.xpose.msra.mxu0 0
        %437 = vmatprep.subr.bf16.mxu0 0
        %438 = vmatpush1.bf16.xpose.msra.mxu0 0
        %439 = vmatprep.subr.bf16.mxu0 0
        %440 = vmatpush1.bf16.xpose.msra.mxu0 0
        %441 = vmatprep.subr.bf16.mxu0 0
        %442 = vmatpush1.bf16.xpose.msra.mxu0 %v425
        %443 = vmatprep.subr.bf16.mxu0 0
        %444 = vmatpush2.bf16.xpose.msra.mxu0 0
        %445 = vmatprep.subr.bf16.mxu0 0
        %446 = vmatpush2.bf16.xpose.msra.mxu0 0
        %447 = vmatprep.subr.bf16.mxu0 0
        %448 = vmatpush2.bf16.xpose.msra.mxu0 0
        %449 = vmatprep.subr.bf16.mxu0 0
        %450 = vmatpush2.bf16.xpose.msra.mxu0 0
        %451 = vmatprep.subr.bf16.mxu0 0
        %452 = vmatpush2.bf16.xpose.msra.mxu0 0
        %453 = vmatprep.subr.bf16.mxu0 0
        %454 = vmatpush2.bf16.xpose.msra.mxu0 0
        %455 = vmatprep.subr.bf16.mxu0 0
        %456 = vmatpush2.bf16.xpose.msra.mxu0 0
        %457 = vmatprep.subr.bf16.mxu0 0
        %458 = vmatpush2.bf16.xpose.msra.mxu0 0
        %459 = vmatprep.mubr.bf16.mxu0 0
        %460 = vmatmul.mubr.bf16.gmra.mxu0 %v422
        %v461 = vpop.f32.mrf.mxu0
        %v462 = vadd.f32 %v419, %v461
        %v463 = vpop.f32.mrf.mxu0
        %v464 = vpop.f32.mrf.mxu0
        %v465 = vpop.f32.mrf.mxu0
        %466 = vdwg.mxu0
        %v468 = vsel %vm420, %v408, 0
        %v471 = vsel %vm420, %v412, 0
        %473 = vmatprep.subr.bf16.mxu0 0
        %474 = vmatpush1.bf16.xpose.msra.mxu0 0
        %475 = vmatprep.subr.bf16.mxu0 0
        %476 = vmatpush1.bf16.xpose.msra.mxu0 0
        %477 = vmatprep.subr.bf16.mxu0 0
        %478 = vmatpush1.bf16.xpose.msra.mxu0 0
        %479 = vmatprep.subr.bf16.mxu0 0
        %480 = vmatpush1.bf16.xpose.msra.mxu0 0
        %481 = vmatprep.subr.bf16.mxu0 0
        %482 = vmatpush1.bf16.xpose.msra.mxu0 0
        %483 = vmatprep.subr.bf16.mxu0 0
        %484 = vmatpush1.bf16.xpose.msra.mxu0 0
        %485 = vmatprep.subr.bf16.mxu0 0
        %486 = vmatpush1.bf16.xpose.msra.mxu0 0
        %487 = vmatprep.subr.bf16.mxu0 0
        %488 = vmatpush1.bf16.xpose.msra.mxu0 %v471
        %489 = vmatprep.subr.bf16.mxu0 0
        %490 = vmatpush2.bf16.xpose.msra.mxu0 0
        %491 = vmatprep.subr.bf16.mxu0 0
        %492 = vmatpush2.bf16.xpose.msra.mxu0 0
        %493 = vmatprep.subr.bf16.mxu0 0
        %494 = vmatpush2.bf16.xpose.msra.mxu0 0
        %495 = vmatprep.subr.bf16.mxu0 0
        %496 = vmatpush2.bf16.xpose.msra.mxu0 0
        %497 = vmatprep.subr.bf16.mxu0 0
        %498 = vmatpush2.bf16.xpose.msra.mxu0 0
        %499 = vmatprep.subr.bf16.mxu0 0
        %500 = vmatpush2.bf16.xpose.msra.mxu0 0
        %501 = vmatprep.subr.bf16.mxu0 0
        %502 = vmatpush2.bf16.xpose.msra.mxu0 0
        %503 = vmatprep.subr.bf16.mxu0 0
        %504 = vmatpush2.bf16.xpose.msra.mxu0 0
        %505 = vmatprep.mubr.bf16.mxu0 0
        %506 = vmatmul.mubr.bf16.gmra.mxu0 %v468
        %v507 = vpop.f32.mrf.mxu0
        %v508 = vadd.f32 %v419, %v507
        %v509 = vpop.f32.mrf.mxu0
        %v510 = vpop.f32.mrf.mxu0
        %v511 = vpop.f32.mrf.mxu0
        %512 = vdwg.mxu0
        %v514 = vsel %vm420, %v409, 0
        %v517 = vsel %vm420, %v413, 0
        %519 = vmatprep.subr.bf16.mxu0 0
        %520 = vmatpush1.bf16.xpose.msra.mxu0 0
        %521 = vmatprep.subr.bf16.mxu0 0
        %522 = vmatpush1.bf16.xpose.msra.mxu0 0
        %523 = vmatprep.subr.bf16.mxu0 0
        %524 = vmatpush1.bf16.xpose.msra.mxu0 0
        %525 = vmatprep.subr.bf16.mxu0 0
        %526 = vmatpush1.bf16.xpose.msra.mxu0 0
        %527 = vmatprep.subr.bf16.mxu0 0
        %528 = vmatpush1.bf16.xpose.msra.mxu0 0
        %529 = vmatprep.subr.bf16.mxu0 0
        %530 = vmatpush1.bf16.xpose.msra.mxu0 0
        %531 = vmatprep.subr.bf16.mxu0 0
        %532 = vmatpush1.bf16.xpose.msra.mxu0 0
        %533 = vmatprep.subr.bf16.mxu0 0
        %534 = vmatpush1.bf16.xpose.msra.mxu0 %v517
        %535 = vmatprep.subr.bf16.mxu0 0
        %536 = vmatpush2.bf16.xpose.msra.mxu0 0
        %537 = vmatprep.subr.bf16.mxu0 0
        %538 = vmatpush2.bf16.xpose.msra.mxu0 0
        %539 = vmatprep.subr.bf16.mxu0 0
        %540 = vmatpush2.bf16.xpose.msra.mxu0 0
        %541 = vmatprep.subr.bf16.mxu0 0
        %542 = vmatpush2.bf16.xpose.msra.mxu0 0
        %543 = vmatprep.subr.bf16.mxu0 0
        %544 = vmatpush2.bf16.xpose.msra.mxu0 0
        %545 = vmatprep.subr.bf16.mxu0 0
        %546 = vmatpush2.bf16.xpose.msra.mxu0 0
        %547 = vmatprep.subr.bf16.mxu0 0
        %548 = vmatpush2.bf16.xpose.msra.mxu0 0
        %549 = vmatprep.subr.bf16.mxu0 0
        %550 = vmatpush2.bf16.xpose.msra.mxu0 0
        %551 = vmatprep.mubr.bf16.mxu0 0
        %552 = vmatmul.mubr.bf16.gmra.mxu0 %v514
        %v553 = vpop.f32.mrf.mxu0
        %v554 = vadd.f32 %v419, %v553
        %v555 = vpop.f32.mrf.mxu0
        %v556 = vpop.f32.mrf.mxu0
        %v557 = vpop.f32.mrf.mxu0
        %558 = vdwg.mxu0
        %v560 = vsel %vm420, %v410, 0
        %v563 = vsel %vm420, %v414, 0
        %565 = vmatprep.subr.bf16.mxu0 0
        %566 = vmatpush1.bf16.xpose.msra.mxu0 0
        %567 = vmatprep.subr.bf16.mxu0 0
        %568 = vmatpush1.bf16.xpose.msra.mxu0 0
        %569 = vmatprep.subr.bf16.mxu0 0
        %570 = vmatpush1.bf16.xpose.msra.mxu0 0
        %571 = vmatprep.subr.bf16.mxu0 0
        %572 = vmatpush1.bf16.xpose.msra.mxu0 0
        %573 = vmatprep.subr.bf16.mxu0 0
        %574 = vmatpush1.bf16.xpose.msra.mxu0 0
        %575 = vmatprep.subr.bf16.mxu0 0
        %576 = vmatpush1.bf16.xpose.msra.mxu0 0
        %577 = vmatprep.subr.bf16.mxu0 0
        %578 = vmatpush1.bf16.xpose.msra.mxu0 0
        %579 = vmatprep.subr.bf16.mxu0 0
        %580 = vmatpush1.bf16.xpose.msra.mxu0 %v563
        %581 = vmatprep.subr.bf16.mxu0 0
        %582 = vmatpush2.bf16.xpose.msra.mxu0 0
        %583 = vmatprep.subr.bf16.mxu0 0
        %584 = vmatpush2.bf16.xpose.msra.mxu0 0
        %585 = vmatprep.subr.bf16.mxu0 0
        %586 = vmatpush2.bf16.xpose.msra.mxu0 0
        %587 = vmatprep.subr.bf16.mxu0 0
        %588 = vmatpush2.bf16.xpose.msra.mxu0 0
        %589 = vmatprep.subr.bf16.mxu0 0
        %590 = vmatpush2.bf16.xpose.msra.mxu0 0
        %591 = vmatprep.subr.bf16.mxu0 0
        %592 = vmatpush2.bf16.xpose.msra.mxu0 0
        %593 = vmatprep.subr.bf16.mxu0 0
        %594 = vmatpush2.bf16.xpose.msra.mxu0 0
        %595 = vmatprep.subr.bf16.mxu0 0
        %596 = vmatpush2.bf16.xpose.msra.mxu0 0
        %597 = vmatprep.mubr.bf16.mxu0 0
        %598 = vmatmul.mubr.bf16.gmra.mxu0 %v560
        %v599 = vpop.f32.mrf.mxu0
        %v600 = vadd.f32 %v419, %v599
        %v601 = vpop.f32.mrf.mxu0
        %v602 = vpop.f32.mrf.mxu0
        %v603 = vpop.f32.mrf.mxu0
        %604 = vdwg.mxu0
        %vm605 = vcmask 64512
        %v606 = vsel %vm605, %v462, -inf
        %607 = vmax.xlane.f32.xlu0 %v606
        %v608 = vpop.xlane.xlu0 %607
        %v609 = vsel %vm605, %v508, -inf
        %610 = vmax.xlane.f32.xlu0 %v609
        %v611 = vpop.xlane.xlu0 %610
        %v612 = vsel %vm605, %v554, -inf
        %613 = vmax.xlane.f32.xlu0 %v612
        %v614 = vpop.xlane.xlu0 %613
        %v615 = vsel %vm605, %v600, -inf
        %616 = vmax.xlane.f32.xlu0 %v615
        %v617 = vpop.xlane.xlu0 %616
        %v618 = vsub.f32 %v462, %v608
        %v619 = vsub.f32 %v508, %v611
        %v620 = vsub.f32 %v554, %v614
        %v621 = vsub.f32 %v600, %v617
        %v622 = vmul.f32 %v618, 1.442695
        %v623 = vpow.pop %v622
        %v624 = vmul.f32 %v619, 1.442695
        %v625 = vpow.pop %v624
        %v626 = vmul.f32 %v620, 1.442695
        %v627 = vpow.pop %v626
        %v628 = vmul.f32 %v621, 1.442695
        %v629 = vpow.pop %v628
        %v630 = vsel %vm605, %v623, 0.0
        %631 = vadd.xlane.f32.xlu0 %v630
        %v632 = vpop.xlane.xlu0 %631
        %v633 = vsel %vm605, %v625, 0.0
        %634 = vadd.xlane.f32.xlu0 %v633
        %v635 = vpop.xlane.xlu0 %634
        %v636 = vsel %vm605, %v627, 0.0
        %637 = vadd.xlane.f32.xlu0 %v636
        %v638 = vpop.xlane.xlu0 %637
        %v639 = vsel %vm605, %v629, 0.0
        %640 = vadd.xlane.f32.xlu0 %v639
        %v641 = vpop.xlane.xlu0 %640
        %v642 = vrcp.pop %v632
        %v643 = vmul.f32 1.0, %v642
        %v644 = vrcp.pop %v635
        %v645 = vmul.f32 1.0, %v644
        %v646 = vrcp.pop %v638
        %v647 = vmul.f32 1.0, %v646
        %v648 = vrcp.pop %v641
        %v649 = vmul.f32 1.0, %v648
        %v650 = vmul.f32 %v623, %v643
        %v651 = vmul.f32 %v625, %v645
        %v652 = vmul.f32 %v627, %v647
        %v653 = vmul.f32 %v629, %v649
        %v654 = vpack.c.bf16 %v650, %v650
        %v655 = vpack.c.bf16 %v651, %v651
        %v656 = vpack.c.bf16 %v652, %v652
        %v657 = vpack.c.bf16 %v653, %v653
        %v659 = vsel %vm605, %v654, 0
        %vm661 = vcmask 1043456
        %v663 = vsel %vm661, %v415, 0
        %665 = vmatprep.subr.bf16.mxu0 0
        %666 = vmatpush1.bf16.msra.mxu0 0
        %667 = vmatprep.subr.bf16.mxu0 0
        %668 = vmatpush1.bf16.msra.mxu0 0
        %669 = vmatprep.subr.bf16.mxu0 0
        %670 = vmatpush1.bf16.msra.mxu0 0
        %671 = vmatprep.subr.bf16.mxu0 0
        %672 = vmatpush1.bf16.msra.mxu0 0
        %673 = vmatprep.subr.bf16.mxu0 0
        %674 = vmatpush1.bf16.msra.mxu0 0
        %675 = vmatprep.subr.bf16.mxu0 0
        %676 = vmatpush1.bf16.msra.mxu0 0
        %677 = vmatprep.subr.bf16.mxu0 0
        %678 = vmatpush1.bf16.msra.mxu0 0
        %679 = vmatprep.subr.bf16.mxu0 0
        %680 = vmatpush1.bf16.msra.mxu0 %v663
        %681 = vmatprep.subr.bf16.mxu0 0
        %682 = vmatpush2.bf16.msra.mxu0 0
        %683 = vmatprep.subr.bf16.mxu0 0
        %684 = vmatpush2.bf16.msra.mxu0 0
        %685 = vmatprep.subr.bf16.mxu0 0
        %686 = vmatpush2.bf16.msra.mxu0 0
        %687 = vmatprep.subr.bf16.mxu0 0
        %688 = vmatpush2.bf16.msra.mxu0 0
        %689 = vmatprep.subr.bf16.mxu0 0
        %690 = vmatpush2.bf16.msra.mxu0 0
        %691 = vmatprep.subr.bf16.mxu0 0
        %692 = vmatpush2.bf16.msra.mxu0 0
        %693 = vmatprep.subr.bf16.mxu0 0
        %694 = vmatpush2.bf16.msra.mxu0 0
        %695 = vmatprep.subr.bf16.mxu0 0
        %696 = vmatpush2.bf16.msra.mxu0 0
        %697 = vmatprep.mubr.bf16.mxu0 0
        %698 = vmatmul.mubr.bf16.gmra.mxu0 %v659
        %v699 = vpop.f32.mrf.mxu0
        %v700 = vadd.f32 0.0, %v699
        %v701 = vpop.f32.mrf.mxu0
        %v702 = vpop.f32.mrf.mxu0
        %v703 = vpop.f32.mrf.mxu0
        %704 = vdwg.mxu0
        %v706 = vsel %vm605, %v655, 0
        %v709 = vsel %vm661, %v416, 0
        %711 = vmatprep.subr.bf16.mxu0 0
        %712 = vmatpush1.bf16.msra.mxu0 0
        %713 = vmatprep.subr.bf16.mxu0 0
        %714 = vmatpush1.bf16.msra.mxu0 0
        %715 = vmatprep.subr.bf16.mxu0 0
        %716 = vmatpush1.bf16.msra.mxu0 0
        %717 = vmatprep.subr.bf16.mxu0 0
        %718 = vmatpush1.bf16.msra.mxu0 0
        %719 = vmatprep.subr.bf16.mxu0 0
        %720 = vmatpush1.bf16.msra.mxu0 0
        %721 = vmatprep.subr.bf16.mxu0 0
        %722 = vmatpush1.bf16.msra.mxu0 0
        %723 = vmatprep.subr.bf16.mxu0 0
        %724 = vmatpush1.bf16.msra.mxu0 0
        %725 = vmatprep.subr.bf16.mxu0 0
        %726 = vmatpush1.bf16.msra.mxu0 %v709
        %727 = vmatprep.subr.bf16.mxu0 0
        %728 = vmatpush2.bf16.msra.mxu0 0
        %729 = vmatprep.subr.bf16.mxu0 0
        %730 = vmatpush2.bf16.msra.mxu0 0
        %731 = vmatprep.subr.bf16.mxu0 0
        %732 = vmatpush2.bf16.msra.mxu0 0
        %733 = vmatprep.subr.bf16.mxu0 0
        %734 = vmatpush2.bf16.msra.mxu0 0
        %735 = vmatprep.subr.bf16.mxu0 0
        %736 = vmatpush2.bf16.msra.mxu0 0
        %737 = vmatprep.subr.bf16.mxu0 0
        %738 = vmatpush2.bf16.msra.mxu0 0
        %739 = vmatprep.subr.bf16.mxu0 0
        %740 = vmatpush2.bf16.msra.mxu0 0
        %741 = vmatprep.subr.bf16.mxu0 0
        %742 = vmatpush2.bf16.msra.mxu0 0
        %743 = vmatprep.mubr.bf16.mxu0 0
        %744 = vmatmul.mubr.bf16.gmra.mxu0 %v706
        %v745 = vpop.f32.mrf.mxu0
        %v746 = vadd.f32 0.0, %v745
        %v747 = vpop.f32.mrf.mxu0
        %v748 = vpop.f32.mrf.mxu0
        %v749 = vpop.f32.mrf.mxu0
        %750 = vdwg.mxu0
        %v752 = vsel %vm605, %v656, 0
        %v755 = vsel %vm661, %v417, 0
        %757 = vmatprep.subr.bf16.mxu0 0
        %758 = vmatpush1.bf16.msra.mxu0 0
        %759 = vmatprep.subr.bf16.mxu0 0
        %760 = vmatpush1.bf16.msra.mxu0 0
        %761 = vmatprep.subr.bf16.mxu0 0
        %762 = vmatpush1.bf16.msra.mxu0 0
        %763 = vmatprep.subr.bf16.mxu0 0
        %764 = vmatpush1.bf16.msra.mxu0 0
        %765 = vmatprep.subr.bf16.mxu0 0
        %766 = vmatpush1.bf16.msra.mxu0 0
        %767 = vmatprep.subr.bf16.mxu0 0
        %768 = vmatpush1.bf16.msra.mxu0 0
        %769 = vmatprep.subr.bf16.mxu0 0
        %770 = vmatpush1.bf16.msra.mxu0 0
        %771 = vmatprep.subr.bf16.mxu0 0
        %772 = vmatpush1.bf16.msra.mxu0 %v755
        %773 = vmatprep.subr.bf16.mxu0 0
        %774 = vmatpush2.bf16.msra.mxu0 0
        %775 = vmatprep.subr.bf16.mxu0 0
        %776 = vmatpush2.bf16.msra.mxu0 0
        %777 = vmatprep.subr.bf16.mxu0 0
        %778 = vmatpush2.bf16.msra.mxu0 0
        %779 = vmatprep.subr.bf16.mxu0 0
        %780 = vmatpush2.bf16.msra.mxu0 0
        %781 = vmatprep.subr.bf16.mxu0 0
        %782 = vmatpush2.bf16.msra.mxu0 0
        %783 = vmatprep.subr.bf16.mxu0 0
        %784 = vmatpush2.bf16.msra.mxu0 0
        %785 = vmatprep.subr.bf16.mxu0 0
        %786 = vmatpush2.bf16.msra.mxu0 0
        %787 = vmatprep.subr.bf16.mxu0 0
        %788 = vmatpush2.bf16.msra.mxu0 0
        %789 = vmatprep.mubr.bf16.mxu0 0
        %790 = vmatmul.mubr.bf16.gmra.mxu0 %v752
        %v791 = vpop.f32.mrf.mxu0
        %v792 = vadd.f32 0.0, %v791
        %v793 = vpop.f32.mrf.mxu0
        %v794 = vpop.f32.mrf.mxu0
        %v795 = vpop.f32.mrf.mxu0
        %796 = vdwg.mxu0
        %v798 = vsel %vm605, %v657, 0
        %v801 = vsel %vm661, %v418, 0
        %803 = vmatprep.subr.bf16.mxu0 0
        %804 = vmatpush1.bf16.msra.mxu0 0
        %805 = vmatprep.subr.bf16.mxu0 0
        %806 = vmatpush1.bf16.msra.mxu0 0
        %807 = vmatprep.subr.bf16.mxu0 0
        %808 = vmatpush1.bf16.msra.mxu0 0
        %809 = vmatprep.subr.bf16.mxu0 0
        %810 = vmatpush1.bf16.msra.mxu0 0
        %811 = vmatprep.subr.bf16.mxu0 0
        %812 = vmatpush1.bf16.msra.mxu0 0
        %813 = vmatprep.subr.bf16.mxu0 0
        %814 = vmatpush1.bf16.msra.mxu0 0
        %815 = vmatprep.subr.bf16.mxu0 0
        %816 = vmatpush1.bf16.msra.mxu0 0
        %817 = vmatprep.subr.bf16.mxu0 0
        %818 = vmatpush1.bf16.msra.mxu0 %v801
        %819 = vmatprep.subr.bf16.mxu0 0
        %820 = vmatpush2.bf16.msra.mxu0 0
        %821 = vmatprep.subr.bf16.mxu0 0
        %822 = vmatpush2.bf16.msra.mxu0 0
        %823 = vmatprep.subr.bf16.mxu0 0
        %824 = vmatpush2.bf16.msra.mxu0 0
        %825 = vmatprep.subr.bf16.mxu0 0
        %826 = vmatpush2.bf16.msra.mxu0 0
        %827 = vmatprep.subr.bf16.mxu0 0
        %828 = vmatpush2.bf16.msra.mxu0 0
        %829 = vmatprep.subr.bf16.mxu0 0
        %830 = vmatpush2.bf16.msra.mxu0 0
        %831 = vmatprep.subr.bf16.mxu0 0
        %832 = vmatpush2.bf16.msra.mxu0 0
        %833 = vmatprep.subr.bf16.mxu0 0
        %834 = vmatpush2.bf16.msra.mxu0 0
        %835 = vmatprep.mubr.bf16.mxu0 0
        %836 = vmatmul.mubr.bf16.gmra.mxu0 %v798
        %v837 = vpop.f32.mrf.mxu0
        %v838 = vadd.f32 0.0, %v837
        %v839 = vpop.f32.mrf.mxu0
        %v840 = vpop.f32.mrf.mxu0
        %v841 = vpop.f32.mrf.mxu0
        %842 = vdwg.mxu0
        %843 = vst.msk [vmem:[%s388] sm:$0xff] %vm420, %v700
        %844 = vst.msk [vmem:[%s388 + $0x8] sm:$0xff] %vm420, %v746
        %845 = vst.msk [vmem:[%s388 + $0x10] sm:$0xff] %vm420, %v792
        %846 = vst.msk [vmem:[%s388 + $0x18] sm:$0xff] %vm420, %v838
        %vm847 = vcmask 60416
        %848 = vst.msk [vmem:[%s395] sm:$0xf] %vm847, %v654
        %849 = vst.msk [vmem:[%s395 + $0x4] sm:$0xf] %vm847, %v655
        %850 = vst.msk [vmem:[%s395 + $0x8] sm:$0xf] %vm847, %v656
        %851 = vst.msk [vmem:[%s395 + $0xc] sm:$0xf] %vm847, %v657
        %s852 = sand.u32 %s164, 1
        %s853 = scalar_lea.sflag [#allocation4], %s852
        %s854 = sand.u32 %s164, 1
        %s855 = smul.addr %s854, 32
        %s856 = scalar_lea.vmem [#allocation10], %s855
        %s857 = sand.u32 %s192, 1
        %s858 = scalar_lea.sflag [#allocation12], %s857
        %s859 = sand.u32 %s192, 1
        %s860 = smul.addr %s859, 16
        %s861 = scalar_lea.vmem [#allocation11], %s860
        // Predicated region
        $region53: #{tpu_custom_call.1} parent=35 // pred_check
          %p862 = pneg %p174
        $region54: #{tpu_custom_call.1} parent=35 // pred_check_branch
          %864 = sbr.rel (%p862) target = $region56
        $region55: #{tpu_custom_call.1} parent=35 // pred_region
          %s865 = smul.u32 4, %s37
          %s867 = ssub.s32 512, 512
          %868 = vsyncadd %s853, %s867
          %s869 = smul.addr %s36, 4
          %s870 = sadd.s32 %s865, %s869
          %s871 = smul.addr %s870, 128
          %s872 = scalar_lea.hbm %s4, %s871
          %s873 = sshll.u32 %s856, 4
          %s874 = int_to_ptr.vmem [resolvable:$true] %s873
          %879 = dma.vmem_to_hbm [thread:$0]  %s874, 512, %s872, %s853, 128, 128, 8
        $region56: #{tpu_custom_call.1} parent=35 // pred_fallthru
          _
        // Predicated region
        $region57: #{tpu_custom_call.1} parent=35 // pred_check
          %p880 = pneg %p202
        $region58: #{tpu_custom_call.1} parent=35 // pred_check_branch
          %882 = sbr.rel (%p880) target = $region60
        $region59: #{tpu_custom_call.1} parent=35 // pred_region
          %s883 = smul.u32 4, %s37
          %s885 = ssub.s32 256, 256
          %886 = vsyncadd %s858, %s885
          %s887 = smul.addr %s36, 4
          %s888 = sadd.s32 %s883, %s887
          %s889 = smul.addr %s888, 64
          %s890 = scalar_lea.hbm %s5, %s889
          %s891 = sshll.u32 %s861, 4
          %s892 = int_to_ptr.vmem [resolvable:$true] %s891
          %897 = dma.vmem_to_hbm [thread:$0]  %s892, 256, %s890, %s858, 64, 64, 4
        $region60: #{tpu_custom_call.1} parent=35 // pred_fallthru
          _
      $region36: #{tpu_custom_call.1} parent=5 // pred_fallthru
        _
      %p898 = scmp.le.s32.totalorder 2, %s27
      // Predicated region
      $region61: #{tpu_custom_call.1} parent=5 // pred_check
        %p899 = pneg %p898
      $region62: #{tpu_custom_call.1} parent=5 // pred_check_branch
        %901 = sbr.rel (%p899) target = $region64
      $region63: #{tpu_custom_call.1} parent=5 // pred_region
        %s902 = ssub.s32 %s27, 2
        // Predicated region
        $region65: #{tpu_custom_call.1} parent=63 // pred_check
          %p903 = pneg %p180
        $region66: #{tpu_custom_call.1} parent=63 // pred_check_branch
          %905 = sbr.rel (%p903) target = $region68
        $region67: #{tpu_custom_call.1} parent=63 // pred_region
          %s906 = sand.u32 %s165, 1
          %s907 = scalar_lea.sflag [#allocation4], %s906
          %s908 = sand.u32 %s165, 1
          %s909 = smul.addr %s908, 32
          %s910 = scalar_lea.vmem [#allocation10], %s909
          %911 = dma.done %s907, 512
        $region68: #{tpu_custom_call.1} parent=63 // pred_fallthru
          _
        // Predicated region
        $region69: #{tpu_custom_call.1} parent=63 // pred_check
          %p912 = pneg %p208
        $region70: #{tpu_custom_call.1} parent=63 // pred_check_branch
          %914 = sbr.rel (%p912) target = $region72
        $region71: #{tpu_custom_call.1} parent=63 // pred_region
          %s915 = sand.u32 %s193, 1
          %s916 = scalar_lea.sflag [#allocation12], %s915
          %s917 = sand.u32 %s193, 1
          %s918 = smul.addr %s917, 16
          %s919 = scalar_lea.vmem [#allocation11], %s918
          %920 = dma.done %s916, 256
        $region72: #{tpu_custom_call.1} parent=63 // pred_fallthru
          _
      $region64: #{tpu_custom_call.1} parent=5 // pred_fallthru
        _
    $region6: #{tpu_custom_call.1} parent=1 // loop_footer
      %s31 = sadd.s32 1, %s27
    $region7: #{tpu_custom_call.1} parent=1 // loop_footer_branch
      %26 = sbr.rel target = $region3
    $region8: #{tpu_custom_call.1} parent=1 // loop_exit
      _
    %921 = vsyncpa [#allocation3], 1
    %s922 = scalar_lea.sflag [#allocation3], 1
    %923 = vsyncpa %s922, 1
    %924 = vsyncpa [#allocation6], 1
    %s925 = scalar_lea.sflag [#allocation6], 1
    %926 = vsyncpa %s925, 1
    %927 = vsyncpa [#allocation9], 1
    %s928 = scalar_lea.sflag [#allocation9], 1
    %929 = vsyncpa %s928, 1
    %930 = vsyncpa [#allocation4], 1
    %s931 = scalar_lea.sflag [#allocation4], 1
    %932 = vsyncpa %s931, 1
    %933 = vsyncpa [#allocation12], 1
    %s934 = scalar_lea.sflag [#allocation12], 1
    %935 = vsyncpa %s934, 1

</llo_original>
